<compile_context>
chip_gen: v6e
topology: v6e:2x2x1
jax: 0.10.0
libtpu: 0.0.40
codegen_flags: <defaults>
</compile_context>

<pallas_src>
from typing import NamedTuple

import jax
import jax.numpy as jnp
from jax.experimental import pallas as pl
from jax.experimental.pallas import tpu as pltpu


def _round_up(n: int, m: int) -> int:
    return ((n + m - 1) // m) * m


def _choose_tile(dim: int, candidates, align: int):
    """Pick the tile that minimizes padded extent for `dim` (ties -> larger tile)."""
    aligned = _round_up(max(dim, 1), align)
    best_t = best_p = None
    for cand in candidates:
        t = _round_up(min(cand, aligned), align)
        p = _round_up(aligned, t)
        if best_p is None or p < best_p or (p == best_p and t > best_t):
            best_t, best_p = t, p
    return best_t, best_p


class LinRegPlan(NamedTuple):
    B: int
    In: int
    Out: int
    Bp: int
    Inp: int
    Outp: int
    tm: int
    tn: int
    tk: int


def linreg_plan(B: int, In: int, Out: int) -> LinRegPlan:
    # Large tiles (big VMEM headroom on v5e/v6e, still < ~32 MiB of buffers so
    # it fits v7x's 64 MiB), chosen to minimize padding waste.
    tm, Bp = _choose_tile(B, (512, 256, 128), 8)
    tk, Inp = _choose_tile(In, (2048, 1024, 512, 256), 128)
    tn, Outp = _choose_tile(Out, (1024, 512, 256), 128)

    # Expose >= 2 parallel (i, j) tiles so both v7x TensorCores get work
    # (no effect on single-TC v5e/v6e).
    if (Bp // tm) * (Outp // tn) == 1:
        if Outp >= 256:
            tn = Outp // 2 if (Outp // 2) % 128 == 0 else 128
        elif Bp >= 16:
            tm = Bp // 2 if (Bp // 2) % 8 == 0 else 8

    return LinRegPlan(B, In, Out, Bp, Inp, Outp, tm, tn, tk)


def linreg_prepare(db, w_t, b, plan: LinRegPlan):
    """One-time parameter prep (hoist out of the serving loop).

    Folds the per-feature db scale into the weight rows (exact: db == 2) and
    pads W/b to lane-aligned extents once, instead of re-padding every call.
    """
    In, Out, Inp, Outp = plan.In, plan.Out, plan.Inp, plan.Outp
    w_folded = (w_t * db.reshape(In, 1)).astype(jnp.float32)   # (In, Out)
    b_row = b.reshape(1, Out).astype(jnp.float32)
    if (In, Out) == (Inp, Outp):
        return w_folded, b_row
    wp = jnp.zeros((Inp, Outp), jnp.float32).at[:In, :Out].set(w_folded)
    bp = jnp.zeros((1, Outp), jnp.float32).at[:, :Out].set(b_row)
    return wp, bp


def _vmem_limit_bytes(default=48 * 1024 * 1024):
    """Per-generation scoped-VMEM limit: 3/4 of physical, capped at 100 MiB."""
    try:
        cap = getattr(pltpu.get_tpu_info(), "vmem_capacity_bytes", None)
        if cap:
            return min((3 * int(cap)) // 4, 100 * 1024 * 1024)
    except Exception:
        pass
    return default


def _linreg_kernel(x_ref, w_ref, b_ref, o_ref, acc_ref):
    k = pl.program_id(2)

    @pl.when(k == 0)
    def _():
        acc_ref[...] = jnp.zeros_like(acc_ref)

    # f32 operands + HIGHEST precision -> full-precision MXU path, matching the
    # f32 PyTorch Linear (the bf16 fast path is what failed the tolerance check).
    acc_ref[...] += jnp.dot(
        x_ref[...],
        w_ref[...],
        preferred_element_type=jnp.float32,
        precision=jax.lax.Precision.HIGHEST,
    )

    # Bias added exactly once, in the epilogue of the k-reduction.
    @pl.when(k == pl.num_programs(2) - 1)
    def _():
        o_ref[...] = (acc_ref[...] + b_ref[...]).astype(o_ref.dtype)


def linreg_apply(x, wp, bp, plan: LinRegPlan):
    """y = x @ wp + bp  with wp already db-folded/padded (see linreg_prepare)."""
    B, In, Out = plan.B, plan.In, plan.Out
    Bp, Inp, Outp = plan.Bp, plan.Inp, plan.Outp
    tm, tn, tk = plan.tm, plan.tn, plan.tk

    # Skip the padding pass entirely when x is already aligned.
    if (B, In) == (Bp, Inp):
        xp = x
    else:
        xp = jnp.zeros((Bp, Inp), x.dtype).at[:B, :In].set(x)

    gi, gj, gk = Bp // tm, Outp // tn, Inp // tk

    # HBM traffic including cross-tile re-streaming: x is re-fetched once per
    # j tile, W once per i tile.
    cost = pl.CostEstimate(
        flops=2 * Bp * Inp * Outp,
        transcendentals=0,
        bytes_accessed=(
            4 * Bp * Inp * gj      # x (f32), re-streamed per j tile
            + 4 * Inp * Outp * gi  # folded W (f32), re-streamed per i tile
            + 4 * Bp * Outp        # output (f32)
            + 4 * Outp * gi        # bias row per i tile
        ),
    )

    out_p = pl.pallas_call(
        _linreg_kernel,
        out_shape=jax.ShapeDtypeStruct((Bp, Outp), x.dtype),
        grid_spec=pltpu.PrefetchScalarGridSpec(
            num_scalar_prefetch=0,
            grid=(gi, gj, gk),
            in_specs=[
                pl.BlockSpec((tm, tk), lambda i, j, k: (i, k)),   # x tile
                pl.BlockSpec((tk, tn), lambda i, j, k: (k, j)),   # db-folded W tile
                pl.BlockSpec((1, tn), lambda i, j, k: (0, j)),    # bias row slice
            ],
            out_specs=pl.BlockSpec((tm, tn), lambda i, j, k: (i, j)),
            scratch_shapes=[pltpu.VMEM((tm, tn), jnp.float32)],
        ),
        compiler_params=pltpu.CompilerParams(
            dimension_semantics=("parallel", "parallel", "arbitrary"),
            vmem_limit_bytes=_vmem_limit_bytes(),
        ),
        cost_estimate=cost,
    )(xp, wp, bp)

    if (B, Out) == (Bp, Outp):
        return out_p
    return out_p[:B, :Out]


def linear_rression(x, db, w_t, b):
    """Convenience one-shot wrapper: y = (db * x) @ w_t + b."""
    B, In = x.shape
    Out = w_t.shape[1]
    plan = linreg_plan(B, In, Out)
    wp, bp = linreg_prepare(db, w_t, b, plan)
    return linreg_apply(x, wp, bp, plan)


if __name__ == "__main__":
    # Small shapes consistent with LinearRression(input_size, out_size).
    batch, input_size, out_size = 8, 32, 16

    key = jax.random.PRNGKey(0)
    kx, kw, kb = jax.random.split(key, 3)

    # x = np.random.randn(...) * 4 analogue.
    x = jax.random.normal(kx, (batch, input_size), dtype=jnp.float32) * 4.0

    # nn.Linear-style init: uniform(-1/sqrt(in), 1/sqrt(in)).
    bound = 1.0 / jnp.sqrt(jnp.float32(input_size))
    w = jax.random.uniform(kw, (out_size, input_size), jnp.float32, -bound, bound)
    b = jax.random.uniform(kb, (out_size,), jnp.float32, -bound, bound)

    # self.db = Variable(torch.ones(input_size) * 2)
    db = jnp.full((input_size,), 2.0, dtype=jnp.float32)

    w_t = w.T  # (In, Out)

    # One-time param prep (hoisted), then the per-call kernel.
    plan = linreg_plan(batch, input_size, out_size)
    wp, bp = linreg_prepare(db, w_t, b, plan)
    y = linreg_apply(x, wp, bp, plan)
    jax.block_until_ready(y)

    # Reference (full-precision f32 dot) — tight tolerance now that the kernel
    # runs the f32 MXU path.
    y_ref = jnp.dot(db.reshape(1, -1) * x, w_t,
                    precision=jax.lax.Precision.HIGHEST) + b.reshape(1, -1)
    assert y.shape == y_ref.shape
    assert jnp.allclose(y, y_ref, atol=1e-3, rtol=1e-3), "mismatch vs reference"

    print("KERNEL_OK")
</pallas_src>

<mosaic_0001>
module attributes {stable_mosaic.version = 11 : i64} {
  func.func @_linreg_kernel(%arg0: i32, %arg1: i32, %arg2: i32, %arg3: memref<8x128xf32, #tpu.memory_space<vmem>>, %arg4: memref<128x128xf32, #tpu.memory_space<vmem>>, %arg5: memref<1x128xf32, #tpu.memory_space<vmem>>, %arg6: memref<8x128xf32, #tpu.memory_space<vmem>>, %arg7: memref<8x128xf32, #tpu.memory_space<vmem>>) attributes {dimension_semantics = [#tpu.dimension_semantics<parallel>, #tpu.dimension_semantics<parallel>, #tpu.dimension_semantics<arbitrary>], iteration_bounds = array<i64: 1, 1, 1>, scalar_prefetch = 0 : i64, scratch_operands = 1 : i64, tpu.core_type = #tpu.core_type<tc>, window_params = [{transform_indices = @transform_0, window_bounds = array<i64: 8, 128>}, {transform_indices = @transform_1, window_bounds = array<i64: 128, 128>}, {transform_indices = @transform_2, window_bounds = array<i64: 1, 128>}, {transform_indices = @transform_3, window_bounds = array<i64: 8, 128>}]} {
    %c0_i32 = arith.constant 0 : i32
    %0 = arith.cmpi eq, %arg2, %c0_i32 : i32
    %1 = arith.extui %0 : i1 to i32
    %c0_i32_0 = arith.constant 0 : i32
    %2 = arith.cmpi ne, %1, %c0_i32_0 : i32
    scf.if %2 {
      %cst_10 = arith.constant 0.000000e+00 : f32
      %12 = vector.broadcast %cst_10 : f32 to vector<8x128xf32>
      %c0_11 = arith.constant 0 : index
      %c0_12 = arith.constant 0 : index
      %13 = vector.load %arg7[%c0_11, %c0_12] : memref<8x128xf32, #tpu.memory_space<vmem>>, vector<8x128xf32>
      tpu.vector_store %arg7[%c0_11, %c0_12], %12 {strides = array<i32>} : memref<8x128xf32, #tpu.memory_space<vmem>>, vector<8x128xf32>,
    } else {
    }
    %c0 = arith.constant 0 : index
    %c0_1 = arith.constant 0 : index
    %3 = vector.load %arg7[%c0, %c0_1] : memref<8x128xf32, #tpu.memory_space<vmem>>, vector<8x128xf32>
    %c0_2 = arith.constant 0 : index
    %c0_3 = arith.constant 0 : index
    %4 = vector.load %arg3[%c0_2, %c0_3] : memref<8x128xf32, #tpu.memory_space<vmem>>, vector<8x128xf32>
    %c0_4 = arith.constant 0 : index
    %c0_5 = arith.constant 0 : index
    %5 = vector.load %arg4[%c0_4, %c0_5] : memref<128x128xf32, #tpu.memory_space<vmem>>, vector<128x128xf32>
    %cst = arith.constant dense<0.000000e+00> : vector<8x128xf32>
    %6 = tpu.matmul %4, %5, %cst {dimension_numbers = #tpu.dot_dimension_numbers<[1], [0], [0], [1], [0, 0, 1, 1], [], []>, precision = #tpu.contract_precision<fp32>} : vector<8x128xf32>, vector<128x128xf32>, vector<8x128xf32> -> vector<8x128xf32>
    %7 = arith.addf %3, %6 : vector<8x128xf32>
    %c0_6 = arith.constant 0 : index
    %c0_7 = arith.constant 0 : index
    %8 = vector.load %arg7[%c0_6, %c0_7] : memref<8x128xf32, #tpu.memory_space<vmem>>, vector<8x128xf32>
    tpu.vector_store %arg7[%c0_6, %c0_7], %7 {strides = array<i32>} : memref<8x128xf32, #tpu.memory_space<vmem>>, vector<8x128xf32>,
    %c0_i32_8 = arith.constant 0 : i32
    %9 = arith.cmpi eq, %arg2, %c0_i32_8 : i32
    %10 = arith.extui %9 : i1 to i32
    %c0_i32_9 = arith.constant 0 : i32
    %11 = arith.cmpi ne, %10, %c0_i32_9 : i32
    scf.if %11 {
      %c0_10 = arith.constant 0 : index
      %c0_11 = arith.constant 0 : index
      %12 = vector.load %arg7[%c0_10, %c0_11] : memref<8x128xf32, #tpu.memory_space<vmem>>, vector<8x128xf32>
      %c0_12 = arith.constant 0 : index
      %c0_13 = arith.constant 0 : index
      %13 = vector.load %arg5[%c0_12, %c0_13] : memref<1x128xf32, #tpu.memory_space<vmem>>, vector<1x128xf32>
      %14 = vector.broadcast %13 : vector<1x128xf32> to vector<8x128xf32>
      %15 = arith.addf %12, %14 : vector<8x128xf32>
      %c0_14 = arith.constant 0 : index
      %c0_15 = arith.constant 0 : index
      %16 = vector.load %arg6[%c0_14, %c0_15] : memref<8x128xf32, #tpu.memory_space<vmem>>, vector<8x128xf32>
      tpu.vector_store %arg6[%c0_14, %c0_15], %15 {strides = array<i32>} : memref<8x128xf32, #tpu.memory_space<vmem>>, vector<8x128xf32>,
    } else {
    }
    return
  }
  func.func @transform_0(%arg0: i32, %arg1: i32, %arg2: i32) -> (i32, i32) {
    %c0_i32 = arith.constant 0 : i32
    return %arg0, %arg2 : i32, i32
  }
  func.func @transform_1(%arg0: i32, %arg1: i32, %arg2: i32) -> (i32, i32) {
    %c0_i32 = arith.constant 0 : i32
    return %arg2, %arg1 : i32, i32
  }
  func.func @transform_2(%arg0: i32, %arg1: i32, %arg2: i32) -> (i32, i32) {
    %c0_i32 = arith.constant 0 : i32
    %c0_i32_0 = arith.constant 0 : i32
    return %c0_i32, %arg1 : i32, i32
  }
  func.func @transform_3(%arg0: i32, %arg1: i32, %arg2: i32) -> (i32, i32) {
    %c0_i32 = arith.constant 0 : i32
    return %arg0, %arg1 : i32, i32
  }
}

</mosaic_0001>

<llo_original>
// kernel: tpu_custom_call.1
$region0: #{tpu_custom_call.1}
  #allocation0 [shape = 'u32[]', space=smem, size = 0x4, offset = 0x4, fixed_abs, tag = 'smem constant byte address 0x4 - core index']
  #allocation1 [shape = 'u32[144,128]{1,0:T(1,128)}', space=vmem, size = 0x12000, scoped, tag = 'internal scratch']
  #allocation2 [shape = 'f32[8,128]{1,0:T(8,128)}', space=vmem, size = 0x1000, scoped, tag = 'scratch operand']
  %s0 = inlined_call_operand.hbm [shape: f32[8,128], index: 0, kind: input, shape index: {}]
  %s1 = inlined_call_operand.hbm [shape: f32[128,128], index: 1, kind: input, shape index: {}]
  %s2 = inlined_call_operand.vmem [shape: f32[1,128], index: 2, kind: input, shape index: {}]
  %s3 = inlined_call_operand.hbm [shape: f32[8,128], index: 3, kind: output, shape index: {}]
  %s4 = sld [smem:[#allocation0]]
  $region38: #{tpu_custom_call.1} parent=0
    _
  %s6 = ssub.s32 1, %s4
  %s7 = scalar_select 0, %s6, %s4
  $region1: #{tpu_custom_call.1} parent=0
    #allocation3 [shape = 'u8[4096]{0}', space=vmem, size = 0x1000, scoped, tag = 'input window, operand 0, single buffered']
    #allocation4 [shape = 's32[1]{0}', space=sflag, size = 0x4, scoped, tag = 'scoped memory for tpu_custom_call.1']
    #allocation5 [shape = 's32[1]{0}', space=sflag, size = 0x4, scoped, tag = 'scoped memory for tpu_custom_call.1']
    #allocation6 [shape = 'u8[65536]{0}', space=vmem, size = 0x10000, scoped, tag = 'input window, operand 1, single buffered']
    #allocation7 [shape = 's32[1]{0}', space=sflag, size = 0x4, scoped, tag = 'scoped memory for tpu_custom_call.1']
    #allocation8 [shape = 'u8[4096]{0}', space=vmem, size = 0x1000, scoped, tag = 'output window, operand 0, single buffered']
    %8 = vsyncpa [#allocation4], 0
    %9 = vsyncpa [#allocation7], 0
    %10 = vsyncpa [#allocation5], 0
    // Predicated region
    $region2: #{tpu_custom_call.1} parent=1 // pred_check
      _
    $region3: #{tpu_custom_call.1} parent=1 // pred_check_branch
      %12 = sbr.rel (0) target = $region5
    $region4: #{tpu_custom_call.1} parent=1 // pred_region
      %s14 = ssub.s32 128, 128
      %15 = vsyncadd [#allocation4], %s14
      %s17 = sshll.u32 [#allocation3], 4
      %s18 = int_to_ptr.vmem [resolvable:$true] %s17
      %20 = dma.hbm_to_vmem [thread:$0]  %s0, 128, %s18, [#allocation4]
    $region5: #{tpu_custom_call.1} parent=1 // pred_fallthru
      _
    // Predicated region
    $region6: #{tpu_custom_call.1} parent=1 // pred_check
      _
    $region7: #{tpu_custom_call.1} parent=1 // pred_check_branch
      %22 = sbr.rel (0) target = $region9
    $region8: #{tpu_custom_call.1} parent=1 // pred_region
      %s24 = ssub.s32 2048, 2048
      %25 = vsyncadd [#allocation7], %s24
      %s26 = sshll.u32 [#allocation6], 4
      %s27 = int_to_ptr.vmem [resolvable:$true] %s26
      %32 = dma.hbm_to_vmem [thread:$0]  %s1, 2048, %s27, [#allocation7], 128, 128, 8
    $region9: #{tpu_custom_call.1} parent=1 // pred_fallthru
      _
    // Predicated region
    $region10: #{tpu_custom_call.1} parent=1 // pred_check
      _
    $region11: #{tpu_custom_call.1} parent=1 // pred_check_branch
      %34 = sbr.rel (0) target = $region13
    $region12: #{tpu_custom_call.1} parent=1 // pred_region
      _
    $region13: #{tpu_custom_call.1} parent=1 // pred_fallthru
      _
    // Predicated region
    $region14: #{tpu_custom_call.1} parent=1 // pred_check
      _
    $region15: #{tpu_custom_call.1} parent=1 // pred_check_branch
      %36 = sbr.rel (0) target = $region17
    $region16: #{tpu_custom_call.1} parent=1 // pred_region
      %37 = dma.done [#allocation4], 128
    $region17: #{tpu_custom_call.1} parent=1 // pred_fallthru
      _
    // Predicated region
    $region18: #{tpu_custom_call.1} parent=1 // pred_check
      _
    $region19: #{tpu_custom_call.1} parent=1 // pred_check_branch
      %39 = sbr.rel (0) target = $region21
    $region20: #{tpu_custom_call.1} parent=1 // pred_region
      %40 = dma.done [#allocation7], 2048
    $region21: #{tpu_custom_call.1} parent=1 // pred_fallthru
      _
    %p41 = scmp.eq.s32.totalorder 0, 0
    // Predicated region
    $region22: #{tpu_custom_call.1} parent=1 // pred_check
      %p42 = pneg %p41
    $region23: #{tpu_custom_call.1} parent=1 // pred_check_branch
      %44 = sbr.rel (%p42) target = $region25
    $region24: #{tpu_custom_call.1} parent=1 // pred_region
      %45 = vst [vmem:[#allocation2] sm:$0xff] 0.0
    $region25: #{tpu_custom_call.1} parent=1 // pred_fallthru
      _
    %v46 = vld [vmem:[#allocation2] sm:$0xff]
    %v47 = vld [vmem:[#allocation3] sm:$0xff]
    %v48 = vld [vmem:[#allocation6] sm:$0xff]
    %v49 = vld [vmem:[#allocation6 + $0x8] sm:$0xff]
    %v50 = vld [vmem:[#allocation6 + $0x10] sm:$0xff]
    %v51 = vld [vmem:[#allocation6 + $0x18] sm:$0xff]
    %v52 = vld [vmem:[#allocation6 + $0x20] sm:$0xff]
    %v53 = vld [vmem:[#allocation6 + $0x28] sm:$0xff]
    %v54 = vld [vmem:[#allocation6 + $0x30] sm:$0xff]
    %v55 = vld [vmem:[#allocation6 + $0x38] sm:$0xff]
    %v56 = vld [vmem:[#allocation6 + $0x40] sm:$0xff]
    %v57 = vld [vmem:[#allocation6 + $0x48] sm:$0xff]
    %v58 = vld [vmem:[#allocation6 + $0x50] sm:$0xff]
    %v59 = vld [vmem:[#allocation6 + $0x58] sm:$0xff]
    %v60 = vld [vmem:[#allocation6 + $0x60] sm:$0xff]
    %v61 = vld [vmem:[#allocation6 + $0x68] sm:$0xff]
    %v62 = vld [vmem:[#allocation6 + $0x70] sm:$0xff]
    %v63 = vld [vmem:[#allocation6 + $0x78] sm:$0xff]
    %64 = vmatprep.subr.mxu0 0.0
    %v65 = vand.u32 %v63, 4294901760
    %66 = vmatpush1.msra.mxu0 %v65
    %67 = vmatprep.subr.mxu0 0.0
    %v68 = vand.u32 %v62, 4294901760
    %69 = vmatpush1.msra.mxu0 %v68
    %70 = vmatprep.subr.mxu0 0.0
    %v71 = vand.u32 %v61, 4294901760
    %72 = vmatpush1.msra.mxu0 %v71
    %73 = vmatprep.subr.mxu0 0.0
    %v74 = vand.u32 %v60, 4294901760
    %75 = vmatpush1.msra.mxu0 %v74
    %76 = vmatprep.subr.mxu0 0.0
    %v77 = vand.u32 %v59, 4294901760
    %78 = vmatpush1.msra.mxu0 %v77
    %79 = vmatprep.subr.mxu0 0.0
    %v80 = vand.u32 %v58, 4294901760
    %81 = vmatpush1.msra.mxu0 %v80
    %82 = vmatprep.subr.mxu0 0.0
    %v83 = vand.u32 %v57, 4294901760
    %84 = vmatpush1.msra.mxu0 %v83
    %85 = vmatprep.subr.mxu0 0.0
    %v86 = vand.u32 %v56, 4294901760
    %87 = vmatpush1.msra.mxu0 %v86
    %88 = vmatprep.subr.mxu0 0.0
    %v89 = vand.u32 %v55, 4294901760
    %90 = vmatpush1.msra.mxu0 %v89
    %91 = vmatprep.subr.mxu0 0.0
    %v92 = vand.u32 %v54, 4294901760
    %93 = vmatpush1.msra.mxu0 %v92
    %94 = vmatprep.subr.mxu0 0.0
    %v95 = vand.u32 %v53, 4294901760
    %96 = vmatpush1.msra.mxu0 %v95
    %97 = vmatprep.subr.mxu0 0.0
    %v98 = vand.u32 %v52, 4294901760
    %99 = vmatpush1.msra.mxu0 %v98
    %100 = vmatprep.subr.mxu0 0.0
    %v101 = vand.u32 %v51, 4294901760
    %102 = vmatpush1.msra.mxu0 %v101
    %103 = vmatprep.subr.mxu0 0.0
    %v104 = vand.u32 %v50, 4294901760
    %105 = vmatpush1.msra.mxu0 %v104
    %106 = vmatprep.subr.mxu0 0.0
    %v107 = vand.u32 %v49, 4294901760
    %108 = vmatpush1.msra.mxu0 %v107
    %109 = vmatprep.subr.mxu0 0.0
    %v110 = vand.u32 %v48, 4294901760
    %111 = vmatpush1.msra.mxu0 %v110
    %112 = vmatprep.subr.mxu0 0.0
    %113 = vmatpush2.msra.mxu0 0.0
    %114 = vmatprep.subr.mxu0 0.0
    %115 = vmatpush2.msra.mxu0 0.0
    %116 = vmatprep.subr.mxu0 0.0
    %117 = vmatpush2.msra.mxu0 0.0
    %118 = vmatprep.subr.mxu0 0.0
    %119 = vmatpush2.msra.mxu0 0.0
    %120 = vmatprep.subr.mxu0 0.0
    %121 = vmatpush2.msra.mxu0 0.0
    %122 = vmatprep.subr.mxu0 0.0
    %123 = vmatpush2.msra.mxu0 0.0
    %124 = vmatprep.subr.mxu0 0.0
    %125 = vmatpush2.msra.mxu0 0.0
    %126 = vmatprep.subr.mxu0 0.0
    %127 = vmatpush2.msra.mxu0 0.0
    %128 = vmatprep.subr.mxu0 0.0
    %129 = vmatpush2.msra.mxu0 0.0
    %130 = vmatprep.subr.mxu0 0.0
    %131 = vmatpush2.msra.mxu0 0.0
    %132 = vmatprep.subr.mxu0 0.0
    %133 = vmatpush2.msra.mxu0 0.0
    %134 = vmatprep.subr.mxu0 0.0
    %135 = vmatpush2.msra.mxu0 0.0
    %136 = vmatprep.subr.mxu0 0.0
    %137 = vmatpush2.msra.mxu0 0.0
    %138 = vmatprep.subr.mxu0 0.0
    %139 = vmatpush2.msra.mxu0 0.0
    %140 = vmatprep.subr.mxu0 0.0
    %141 = vmatpush2.msra.mxu0 0.0
    %142 = vmatprep.subr.mxu0 0.0
    %143 = vmatpush2.msra.mxu0 0.0
    %144 = vmatprep.mubr.f32.mxu0 0.0
    %v145 = vand.u32 %v47, 4294901760
    %v146 = vsub.f32 %v47, %v145
    %v147 = vand.u32 %v146, 4294901760
    %v148 = vsub.f32 %v146, %v147
    %v149 = vand.u32 %v148, 4294901760
    %150 = vmatmul.mubr.f32.gmra.mxu0 %v149
    %v151 = vpop.f32.mrf.mxu0
    %v152 = vadd.f32 0.0, %v151
    %v153 = vpop.f32.mrf.mxu0
    %154 = vdwg.mxu0
    %155 = vmatprep.subr.mxu0 0.0
    %v156 = vand.u32 %v63, 4294901760
    %v157 = vsub.f32 %v63, %v156
    %v158 = vand.u32 %v157, 4294901760
    %v159 = vsub.f32 %v157, %v158
    %v160 = vand.u32 %v159, 4294901760
    %161 = vmatpush1.msra.mxu0 %v160
    %162 = vmatprep.subr.mxu0 0.0
    %v163 = vand.u32 %v62, 4294901760
    %v164 = vsub.f32 %v62, %v163
    %v165 = vand.u32 %v164, 4294901760
    %v166 = vsub.f32 %v164, %v165
    %v167 = vand.u32 %v166, 4294901760
    %168 = vmatpush1.msra.mxu0 %v167
    %169 = vmatprep.subr.mxu0 0.0
    %v170 = vand.u32 %v61, 4294901760
    %v171 = vsub.f32 %v61, %v170
    %v172 = vand.u32 %v171, 4294901760
    %v173 = vsub.f32 %v171, %v172
    %v174 = vand.u32 %v173, 4294901760
    %175 = vmatpush1.msra.mxu0 %v174
    %176 = vmatprep.subr.mxu0 0.0
    %v177 = vand.u32 %v60, 4294901760
    %v178 = vsub.f32 %v60, %v177
    %v179 = vand.u32 %v178, 4294901760
    %v180 = vsub.f32 %v178, %v179
    %v181 = vand.u32 %v180, 4294901760
    %182 = vmatpush1.msra.mxu0 %v181
    %183 = vmatprep.subr.mxu0 0.0
    %v184 = vand.u32 %v59, 4294901760
    %v185 = vsub.f32 %v59, %v184
    %v186 = vand.u32 %v185, 4294901760
    %v187 = vsub.f32 %v185, %v186
    %v188 = vand.u32 %v187, 4294901760
    %189 = vmatpush1.msra.mxu0 %v188
    %190 = vmatprep.subr.mxu0 0.0
    %v191 = vand.u32 %v58, 4294901760
    %v192 = vsub.f32 %v58, %v191
    %v193 = vand.u32 %v192, 4294901760
    %v194 = vsub.f32 %v192, %v193
    %v195 = vand.u32 %v194, 4294901760
    %196 = vmatpush1.msra.mxu0 %v195
    %197 = vmatprep.subr.mxu0 0.0
    %v198 = vand.u32 %v57, 4294901760
    %v199 = vsub.f32 %v57, %v198
    %v200 = vand.u32 %v199, 4294901760
    %v201 = vsub.f32 %v199, %v200
    %v202 = vand.u32 %v201, 4294901760
    %203 = vmatpush1.msra.mxu0 %v202
    %204 = vmatprep.subr.mxu0 0.0
    %v205 = vand.u32 %v56, 4294901760
    %v206 = vsub.f32 %v56, %v205
    %v207 = vand.u32 %v206, 4294901760
    %v208 = vsub.f32 %v206, %v207
    %v209 = vand.u32 %v208, 4294901760
    %210 = vmatpush1.msra.mxu0 %v209
    %211 = vmatprep.subr.mxu0 0.0
    %v212 = vand.u32 %v55, 4294901760
    %v213 = vsub.f32 %v55, %v212
    %v214 = vand.u32 %v213, 4294901760
    %v215 = vsub.f32 %v213, %v214
    %v216 = vand.u32 %v215, 4294901760
    %217 = vmatpush1.msra.mxu0 %v216
    %218 = vmatprep.subr.mxu0 0.0
    %v219 = vand.u32 %v54, 4294901760
    %v220 = vsub.f32 %v54, %v219
    %v221 = vand.u32 %v220, 4294901760
    %v222 = vsub.f32 %v220, %v221
    %v223 = vand.u32 %v222, 4294901760
    %224 = vmatpush1.msra.mxu0 %v223
    %225 = vmatprep.subr.mxu0 0.0
    %v226 = vand.u32 %v53, 4294901760
    %v227 = vsub.f32 %v53, %v226
    %v228 = vand.u32 %v227, 4294901760
    %v229 = vsub.f32 %v227, %v228
    %v230 = vand.u32 %v229, 4294901760
    %231 = vmatpush1.msra.mxu0 %v230
    %232 = vmatprep.subr.mxu0 0.0
    %v233 = vand.u32 %v52, 4294901760
    %v234 = vsub.f32 %v52, %v233
    %v235 = vand.u32 %v234, 4294901760
    %v236 = vsub.f32 %v234, %v235
    %v237 = vand.u32 %v236, 4294901760
    %238 = vmatpush1.msra.mxu0 %v237
    %239 = vmatprep.subr.mxu0 0.0
    %v240 = vand.u32 %v51, 4294901760
    %v241 = vsub.f32 %v51, %v240
    %v242 = vand.u32 %v241, 4294901760
    %v243 = vsub.f32 %v241, %v242
    %v244 = vand.u32 %v243, 4294901760
    %245 = vmatpush1.msra.mxu0 %v244
    %246 = vmatprep.subr.mxu0 0.0
    %v247 = vand.u32 %v50, 4294901760
    %v248 = vsub.f32 %v50, %v247
    %v249 = vand.u32 %v248, 4294901760
    %v250 = vsub.f32 %v248, %v249
    %v251 = vand.u32 %v250, 4294901760
    %252 = vmatpush1.msra.mxu0 %v251
    %253 = vmatprep.subr.mxu0 0.0
    %v254 = vand.u32 %v49, 4294901760
    %v255 = vsub.f32 %v49, %v254
    %v256 = vand.u32 %v255, 4294901760
    %v257 = vsub.f32 %v255, %v256
    %v258 = vand.u32 %v257, 4294901760
    %259 = vmatpush1.msra.mxu0 %v258
    %260 = vmatprep.subr.mxu0 0.0
    %v261 = vand.u32 %v48, 4294901760
    %v262 = vsub.f32 %v48, %v261
    %v263 = vand.u32 %v262, 4294901760
    %v264 = vsub.f32 %v262, %v263
    %v265 = vand.u32 %v264, 4294901760
    %266 = vmatpush1.msra.mxu0 %v265
    %267 = vmatprep.subr.mxu0 0.0
    %268 = vmatpush2.msra.mxu0 0.0
    %269 = vmatprep.subr.mxu0 0.0
    %270 = vmatpush2.msra.mxu0 0.0
    %271 = vmatprep.subr.mxu0 0.0
    %272 = vmatpush2.msra.mxu0 0.0
    %273 = vmatprep.subr.mxu0 0.0
    %274 = vmatpush2.msra.mxu0 0.0
    %275 = vmatprep.subr.mxu0 0.0
    %276 = vmatpush2.msra.mxu0 0.0
    %277 = vmatprep.subr.mxu0 0.0
    %278 = vmatpush2.msra.mxu0 0.0
    %279 = vmatprep.subr.mxu0 0.0
    %280 = vmatpush2.msra.mxu0 0.0
    %281 = vmatprep.subr.mxu0 0.0
    %282 = vmatpush2.msra.mxu0 0.0
    %283 = vmatprep.subr.mxu0 0.0
    %284 = vmatpush2.msra.mxu0 0.0
    %285 = vmatprep.subr.mxu0 0.0
    %286 = vmatpush2.msra.mxu0 0.0
    %287 = vmatprep.subr.mxu0 0.0
    %288 = vmatpush2.msra.mxu0 0.0
    %289 = vmatprep.subr.mxu0 0.0
    %290 = vmatpush2.msra.mxu0 0.0
    %291 = vmatprep.subr.mxu0 0.0
    %292 = vmatpush2.msra.mxu0 0.0
    %293 = vmatprep.subr.mxu0 0.0
    %294 = vmatpush2.msra.mxu0 0.0
    %295 = vmatprep.subr.mxu0 0.0
    %296 = vmatpush2.msra.mxu0 0.0
    %297 = vmatprep.subr.mxu0 0.0
    %298 = vmatpush2.msra.mxu0 0.0
    %299 = vmatprep.mubr.f32.mxu0 0.0
    %v300 = vand.u32 %v47, 4294901760
    %301 = vmatmul.mubr.f32.gmra.mxu0 %v300
    %v302 = vpop.f32.mrf.mxu0
    %v303 = vadd.f32 %v152, %v302
    %v304 = vpop.f32.mrf.mxu0
    %305 = vdwg.mxu0
    %306 = vmatprep.subr.mxu0 0.0
    %v307 = vand.u32 %v63, 4294901760
    %v308 = vsub.f32 %v63, %v307
    %309 = vmatpush1.msra.mxu0 %v308
    %310 = vmatprep.subr.mxu0 0.0
    %v311 = vand.u32 %v62, 4294901760
    %v312 = vsub.f32 %v62, %v311
    %313 = vmatpush1.msra.mxu0 %v312
    %314 = vmatprep.subr.mxu0 0.0
    %v315 = vand.u32 %v61, 4294901760
    %v316 = vsub.f32 %v61, %v315
    %317 = vmatpush1.msra.mxu0 %v316
    %318 = vmatprep.subr.mxu0 0.0
    %v319 = vand.u32 %v60, 4294901760
    %v320 = vsub.f32 %v60, %v319
    %321 = vmatpush1.msra.mxu0 %v320
    %322 = vmatprep.subr.mxu0 0.0
    %v323 = vand.u32 %v59, 4294901760
    %v324 = vsub.f32 %v59, %v323
    %325 = vmatpush1.msra.mxu0 %v324
    %326 = vmatprep.subr.mxu0 0.0
    %v327 = vand.u32 %v58, 4294901760
    %v328 = vsub.f32 %v58, %v327
    %329 = vmatpush1.msra.mxu0 %v328
    %330 = vmatprep.subr.mxu0 0.0
    %v331 = vand.u32 %v57, 4294901760
    %v332 = vsub.f32 %v57, %v331
    %333 = vmatpush1.msra.mxu0 %v332
    %334 = vmatprep.subr.mxu0 0.0
    %v335 = vand.u32 %v56, 4294901760
    %v336 = vsub.f32 %v56, %v335
    %337 = vmatpush1.msra.mxu0 %v336
    %338 = vmatprep.subr.mxu0 0.0
    %v339 = vand.u32 %v55, 4294901760
    %v340 = vsub.f32 %v55, %v339
    %341 = vmatpush1.msra.mxu0 %v340
    %342 = vmatprep.subr.mxu0 0.0
    %v343 = vand.u32 %v54, 4294901760
    %v344 = vsub.f32 %v54, %v343
    %345 = vmatpush1.msra.mxu0 %v344
    %346 = vmatprep.subr.mxu0 0.0
    %v347 = vand.u32 %v53, 4294901760
    %v348 = vsub.f32 %v53, %v347
    %349 = vmatpush1.msra.mxu0 %v348
    %350 = vmatprep.subr.mxu0 0.0
    %v351 = vand.u32 %v52, 4294901760
    %v352 = vsub.f32 %v52, %v351
    %353 = vmatpush1.msra.mxu0 %v352
    %354 = vmatprep.subr.mxu0 0.0
    %v355 = vand.u32 %v51, 4294901760
    %v356 = vsub.f32 %v51, %v355
    %357 = vmatpush1.msra.mxu0 %v356
    %358 = vmatprep.subr.mxu0 0.0
    %v359 = vand.u32 %v50, 4294901760
    %v360 = vsub.f32 %v50, %v359
    %361 = vmatpush1.msra.mxu0 %v360
    %362 = vmatprep.subr.mxu0 0.0
    %v363 = vand.u32 %v49, 4294901760
    %v364 = vsub.f32 %v49, %v363
    %365 = vmatpush1.msra.mxu0 %v364
    %366 = vmatprep.subr.mxu0 0.0
    %v367 = vand.u32 %v48, 4294901760
    %v368 = vsub.f32 %v48, %v367
    %369 = vmatpush1.msra.mxu0 %v368
    %370 = vmatprep.subr.mxu0 0.0
    %371 = vmatpush2.msra.mxu0 0.0
    %372 = vmatprep.subr.mxu0 0.0
    %373 = vmatpush2.msra.mxu0 0.0
    %374 = vmatprep.subr.mxu0 0.0
    %375 = vmatpush2.msra.mxu0 0.0
    %376 = vmatprep.subr.mxu0 0.0
    %377 = vmatpush2.msra.mxu0 0.0
    %378 = vmatprep.subr.mxu0 0.0
    %379 = vmatpush2.msra.mxu0 0.0
    %380 = vmatprep.subr.mxu0 0.0
    %381 = vmatpush2.msra.mxu0 0.0
    %382 = vmatprep.subr.mxu0 0.0
    %383 = vmatpush2.msra.mxu0 0.0
    %384 = vmatprep.subr.mxu0 0.0
    %385 = vmatpush2.msra.mxu0 0.0
    %386 = vmatprep.subr.mxu0 0.0
    %387 = vmatpush2.msra.mxu0 0.0
    %388 = vmatprep.subr.mxu0 0.0
    %389 = vmatpush2.msra.mxu0 0.0
    %390 = vmatprep.subr.mxu0 0.0
    %391 = vmatpush2.msra.mxu0 0.0
    %392 = vmatprep.subr.mxu0 0.0
    %393 = vmatpush2.msra.mxu0 0.0
    %394 = vmatprep.subr.mxu0 0.0
    %395 = vmatpush2.msra.mxu0 0.0
    %396 = vmatprep.subr.mxu0 0.0
    %397 = vmatpush2.msra.mxu0 0.0
    %398 = vmatprep.subr.mxu0 0.0
    %399 = vmatpush2.msra.mxu0 0.0
    %400 = vmatprep.subr.mxu0 0.0
    %401 = vmatpush2.msra.mxu0 0.0
    %402 = vmatprep.mubr.f32.mxu0 0.0
    %v403 = vand.u32 %v47, 4294901760
    %v404 = vsub.f32 %v47, %v403
    %405 = vmatmul.mubr.f32.gmra.mxu0 %v404
    %v406 = vpop.f32.mrf.mxu0
    %v407 = vadd.f32 %v303, %v406
    %v408 = vpop.f32.mrf.mxu0
    %409 = vdwg.mxu0
    %410 = vmatprep.subr.mxu0 0.0
    %v411 = vand.u32 %v63, 4294901760
    %412 = vmatpush1.msra.mxu0 %v411
    %413 = vmatprep.subr.mxu0 0.0
    %v414 = vand.u32 %v62, 4294901760
    %415 = vmatpush1.msra.mxu0 %v414
    %416 = vmatprep.subr.mxu0 0.0
    %v417 = vand.u32 %v61, 4294901760
    %418 = vmatpush1.msra.mxu0 %v417
    %419 = vmatprep.subr.mxu0 0.0
    %v420 = vand.u32 %v60, 4294901760
    %421 = vmatpush1.msra.mxu0 %v420
    %422 = vmatprep.subr.mxu0 0.0
    %v423 = vand.u32 %v59, 4294901760
    %424 = vmatpush1.msra.mxu0 %v423
    %425 = vmatprep.subr.mxu0 0.0
    %v426 = vand.u32 %v58, 4294901760
    %427 = vmatpush1.msra.mxu0 %v426
    %428 = vmatprep.subr.mxu0 0.0
    %v429 = vand.u32 %v57, 4294901760
    %430 = vmatpush1.msra.mxu0 %v429
    %431 = vmatprep.subr.mxu0 0.0
    %v432 = vand.u32 %v56, 4294901760
    %433 = vmatpush1.msra.mxu0 %v432
    %434 = vmatprep.subr.mxu0 0.0
    %v435 = vand.u32 %v55, 4294901760
    %436 = vmatpush1.msra.mxu0 %v435
    %437 = vmatprep.subr.mxu0 0.0
    %v438 = vand.u32 %v54, 4294901760
    %439 = vmatpush1.msra.mxu0 %v438
    %440 = vmatprep.subr.mxu0 0.0
    %v441 = vand.u32 %v53, 4294901760
    %442 = vmatpush1.msra.mxu0 %v441
    %443 = vmatprep.subr.mxu0 0.0
    %v444 = vand.u32 %v52, 4294901760
    %445 = vmatpush1.msra.mxu0 %v444
    %446 = vmatprep.subr.mxu0 0.0
    %v447 = vand.u32 %v51, 4294901760
    %448 = vmatpush1.msra.mxu0 %v447
    %449 = vmatprep.subr.mxu0 0.0
    %v450 = vand.u32 %v50, 4294901760
    %451 = vmatpush1.msra.mxu0 %v450
    %452 = vmatprep.subr.mxu0 0.0
    %v453 = vand.u32 %v49, 4294901760
    %454 = vmatpush1.msra.mxu0 %v453
    %455 = vmatprep.subr.mxu0 0.0
    %v456 = vand.u32 %v48, 4294901760
    %457 = vmatpush1.msra.mxu0 %v456
    %458 = vmatprep.subr.mxu0 0.0
    %459 = vmatpush2.msra.mxu0 0.0
    %460 = vmatprep.subr.mxu0 0.0
    %461 = vmatpush2.msra.mxu0 0.0
    %462 = vmatprep.subr.mxu0 0.0
    %463 = vmatpush2.msra.mxu0 0.0
    %464 = vmatprep.subr.mxu0 0.0
    %465 = vmatpush2.msra.mxu0 0.0
    %466 = vmatprep.subr.mxu0 0.0
    %467 = vmatpush2.msra.mxu0 0.0
    %468 = vmatprep.subr.mxu0 0.0
    %469 = vmatpush2.msra.mxu0 0.0
    %470 = vmatprep.subr.mxu0 0.0
    %471 = vmatpush2.msra.mxu0 0.0
    %472 = vmatprep.subr.mxu0 0.0
    %473 = vmatpush2.msra.mxu0 0.0
    %474 = vmatprep.subr.mxu0 0.0
    %475 = vmatpush2.msra.mxu0 0.0
    %476 = vmatprep.subr.mxu0 0.0
    %477 = vmatpush2.msra.mxu0 0.0
    %478 = vmatprep.subr.mxu0 0.0
    %479 = vmatpush2.msra.mxu0 0.0
    %480 = vmatprep.subr.mxu0 0.0
    %481 = vmatpush2.msra.mxu0 0.0
    %482 = vmatprep.subr.mxu0 0.0
    %483 = vmatpush2.msra.mxu0 0.0
    %484 = vmatprep.subr.mxu0 0.0
    %485 = vmatpush2.msra.mxu0 0.0
    %486 = vmatprep.subr.mxu0 0.0
    %487 = vmatpush2.msra.mxu0 0.0
    %488 = vmatprep.subr.mxu0 0.0
    %489 = vmatpush2.msra.mxu0 0.0
    %490 = vmatprep.mubr.f32.mxu0 0.0
    %v491 = vand.u32 %v47, 4294901760
    %v492 = vsub.f32 %v47, %v491
    %v493 = vand.u32 %v492, 4294901760
    %494 = vmatmul.mubr.f32.gmra.mxu0 %v493
    %v495 = vpop.f32.mrf.mxu0
    %v496 = vadd.f32 %v407, %v495
    %v497 = vpop.f32.mrf.mxu0
    %498 = vdwg.mxu0
    %499 = vmatprep.subr.mxu0 0.0
    %v500 = vand.u32 %v63, 4294901760
    %v501 = vsub.f32 %v63, %v500
    %v502 = vand.u32 %v501, 4294901760
    %503 = vmatpush1.msra.mxu0 %v502
    %504 = vmatprep.subr.mxu0 0.0
    %v505 = vand.u32 %v62, 4294901760
    %v506 = vsub.f32 %v62, %v505
    %v507 = vand.u32 %v506, 4294901760
    %508 = vmatpush1.msra.mxu0 %v507
    %509 = vmatprep.subr.mxu0 0.0
    %v510 = vand.u32 %v61, 4294901760
    %v511 = vsub.f32 %v61, %v510
    %v512 = vand.u32 %v511, 4294901760
    %513 = vmatpush1.msra.mxu0 %v512
    %514 = vmatprep.subr.mxu0 0.0
    %v515 = vand.u32 %v60, 4294901760
    %v516 = vsub.f32 %v60, %v515
    %v517 = vand.u32 %v516, 4294901760
    %518 = vmatpush1.msra.mxu0 %v517
    %519 = vmatprep.subr.mxu0 0.0
    %v520 = vand.u32 %v59, 4294901760
    %v521 = vsub.f32 %v59, %v520
    %v522 = vand.u32 %v521, 4294901760
    %523 = vmatpush1.msra.mxu0 %v522
    %524 = vmatprep.subr.mxu0 0.0
    %v525 = vand.u32 %v58, 4294901760
    %v526 = vsub.f32 %v58, %v525
    %v527 = vand.u32 %v526, 4294901760
    %528 = vmatpush1.msra.mxu0 %v527
    %529 = vmatprep.subr.mxu0 0.0
    %v530 = vand.u32 %v57, 4294901760
    %v531 = vsub.f32 %v57, %v530
    %v532 = vand.u32 %v531, 4294901760
    %533 = vmatpush1.msra.mxu0 %v532
    %534 = vmatprep.subr.mxu0 0.0
    %v535 = vand.u32 %v56, 4294901760
    %v536 = vsub.f32 %v56, %v535
    %v537 = vand.u32 %v536, 4294901760
    %538 = vmatpush1.msra.mxu0 %v537
    %539 = vmatprep.subr.mxu0 0.0
    %v540 = vand.u32 %v55, 4294901760
    %v541 = vsub.f32 %v55, %v540
    %v542 = vand.u32 %v541, 4294901760
    %543 = vmatpush1.msra.mxu0 %v542
    %544 = vmatprep.subr.mxu0 0.0
    %v545 = vand.u32 %v54, 4294901760
    %v546 = vsub.f32 %v54, %v545
    %v547 = vand.u32 %v546, 4294901760
    %548 = vmatpush1.msra.mxu0 %v547
    %549 = vmatprep.subr.mxu0 0.0
    %v550 = vand.u32 %v53, 4294901760
    %v551 = vsub.f32 %v53, %v550
    %v552 = vand.u32 %v551, 4294901760
    %553 = vmatpush1.msra.mxu0 %v552
    %554 = vmatprep.subr.mxu0 0.0
    %v555 = vand.u32 %v52, 4294901760
    %v556 = vsub.f32 %v52, %v555
    %v557 = vand.u32 %v556, 4294901760
    %558 = vmatpush1.msra.mxu0 %v557
    %559 = vmatprep.subr.mxu0 0.0
    %v560 = vand.u32 %v51, 4294901760
    %v561 = vsub.f32 %v51, %v560
    %v562 = vand.u32 %v561, 4294901760
    %563 = vmatpush1.msra.mxu0 %v562
    %564 = vmatprep.subr.mxu0 0.0
    %v565 = vand.u32 %v50, 4294901760
    %v566 = vsub.f32 %v50, %v565
    %v567 = vand.u32 %v566, 4294901760
    %568 = vmatpush1.msra.mxu0 %v567
    %569 = vmatprep.subr.mxu0 0.0
    %v570 = vand.u32 %v49, 4294901760
    %v571 = vsub.f32 %v49, %v570
    %v572 = vand.u32 %v571, 4294901760
    %573 = vmatpush1.msra.mxu0 %v572
    %574 = vmatprep.subr.mxu0 0.0
    %v575 = vand.u32 %v48, 4294901760
    %v576 = vsub.f32 %v48, %v575
    %v577 = vand.u32 %v576, 4294901760
    %578 = vmatpush1.msra.mxu0 %v577
    %579 = vmatprep.subr.mxu0 0.0
    %580 = vmatpush2.msra.mxu0 0.0
    %581 = vmatprep.subr.mxu0 0.0
    %582 = vmatpush2.msra.mxu0 0.0
    %583 = vmatprep.subr.mxu0 0.0
    %584 = vmatpush2.msra.mxu0 0.0
    %585 = vmatprep.subr.mxu0 0.0
    %586 = vmatpush2.msra.mxu0 0.0
    %587 = vmatprep.subr.mxu0 0.0
    %588 = vmatpush2.msra.mxu0 0.0
    %589 = vmatprep.subr.mxu0 0.0
    %590 = vmatpush2.msra.mxu0 0.0
    %591 = vmatprep.subr.mxu0 0.0
    %592 = vmatpush2.msra.mxu0 0.0
    %593 = vmatprep.subr.mxu0 0.0
    %594 = vmatpush2.msra.mxu0 0.0
    %595 = vmatprep.subr.mxu0 0.0
    %596 = vmatpush2.msra.mxu0 0.0
    %597 = vmatprep.subr.mxu0 0.0
    %598 = vmatpush2.msra.mxu0 0.0
    %599 = vmatprep.subr.mxu0 0.0
    %600 = vmatpush2.msra.mxu0 0.0
    %601 = vmatprep.subr.mxu0 0.0
    %602 = vmatpush2.msra.mxu0 0.0
    %603 = vmatprep.subr.mxu0 0.0
    %604 = vmatpush2.msra.mxu0 0.0
    %605 = vmatprep.subr.mxu0 0.0
    %606 = vmatpush2.msra.mxu0 0.0
    %607 = vmatprep.subr.mxu0 0.0
    %608 = vmatpush2.msra.mxu0 0.0
    %609 = vmatprep.subr.mxu0 0.0
    %610 = vmatpush2.msra.mxu0 0.0
    %611 = vmatprep.mubr.f32.mxu0 0.0
    %v612 = vand.u32 %v47, 4294901760
    %613 = vmatmul.mubr.f32.gmra.mxu0 %v612
    %v614 = vpop.f32.mrf.mxu0
    %v615 = vadd.f32 %v496, %v614
    %v616 = vpop.f32.mrf.mxu0
    %617 = vdwg.mxu0
    %618 = vmatprep.subr.mxu0 0.0
    %v619 = vand.u32 %v63, 4294901760
    %620 = vmatpush1.msra.mxu0 %v619
    %621 = vmatprep.subr.mxu0 0.0
    %v622 = vand.u32 %v62, 4294901760
    %623 = vmatpush1.msra.mxu0 %v622
    %624 = vmatprep.subr.mxu0 0.0
    %v625 = vand.u32 %v61, 4294901760
    %626 = vmatpush1.msra.mxu0 %v625
    %627 = vmatprep.subr.mxu0 0.0
    %v628 = vand.u32 %v60, 4294901760
    %629 = vmatpush1.msra.mxu0 %v628
    %630 = vmatprep.subr.mxu0 0.0
    %v631 = vand.u32 %v59, 4294901760
    %632 = vmatpush1.msra.mxu0 %v631
    %633 = vmatprep.subr.mxu0 0.0
    %v634 = vand.u32 %v58, 4294901760
    %635 = vmatpush1.msra.mxu0 %v634
    %636 = vmatprep.subr.mxu0 0.0
    %v637 = vand.u32 %v57, 4294901760
    %638 = vmatpush1.msra.mxu0 %v637
    %639 = vmatprep.subr.mxu0 0.0
    %v640 = vand.u32 %v56, 4294901760
    %641 = vmatpush1.msra.mxu0 %v640
    %642 = vmatprep.subr.mxu0 0.0
    %v643 = vand.u32 %v55, 4294901760
    %644 = vmatpush1.msra.mxu0 %v643
    %645 = vmatprep.subr.mxu0 0.0
    %v646 = vand.u32 %v54, 4294901760
    %647 = vmatpush1.msra.mxu0 %v646
    %648 = vmatprep.subr.mxu0 0.0
    %v649 = vand.u32 %v53, 4294901760
    %650 = vmatpush1.msra.mxu0 %v649
    %651 = vmatprep.subr.mxu0 0.0
    %v652 = vand.u32 %v52, 4294901760
    %653 = vmatpush1.msra.mxu0 %v652
    %654 = vmatprep.subr.mxu0 0.0
    %v655 = vand.u32 %v51, 4294901760
    %656 = vmatpush1.msra.mxu0 %v655
    %657 = vmatprep.subr.mxu0 0.0
    %v658 = vand.u32 %v50, 4294901760
    %659 = vmatpush1.msra.mxu0 %v658
    %660 = vmatprep.subr.mxu0 0.0
    %v661 = vand.u32 %v49, 4294901760
    %662 = vmatpush1.msra.mxu0 %v661
    %663 = vmatprep.subr.mxu0 0.0
    %v664 = vand.u32 %v48, 4294901760
    %665 = vmatpush1.msra.mxu0 %v664
    %666 = vmatprep.subr.mxu0 0.0
    %667 = vmatpush2.msra.mxu0 0.0
    %668 = vmatprep.subr.mxu0 0.0
    %669 = vmatpush2.msra.mxu0 0.0
    %670 = vmatprep.subr.mxu0 0.0
    %671 = vmatpush2.msra.mxu0 0.0
    %672 = vmatprep.subr.mxu0 0.0
    %673 = vmatpush2.msra.mxu0 0.0
    %674 = vmatprep.subr.mxu0 0.0
    %675 = vmatpush2.msra.mxu0 0.0
    %676 = vmatprep.subr.mxu0 0.0
    %677 = vmatpush2.msra.mxu0 0.0
    %678 = vmatprep.subr.mxu0 0.0
    %679 = vmatpush2.msra.mxu0 0.0
    %680 = vmatprep.subr.mxu0 0.0
    %681 = vmatpush2.msra.mxu0 0.0
    %682 = vmatprep.subr.mxu0 0.0
    %683 = vmatpush2.msra.mxu0 0.0
    %684 = vmatprep.subr.mxu0 0.0
    %685 = vmatpush2.msra.mxu0 0.0
    %686 = vmatprep.subr.mxu0 0.0
    %687 = vmatpush2.msra.mxu0 0.0
    %688 = vmatprep.subr.mxu0 0.0
    %689 = vmatpush2.msra.mxu0 0.0
    %690 = vmatprep.subr.mxu0 0.0
    %691 = vmatpush2.msra.mxu0 0.0
    %692 = vmatprep.subr.mxu0 0.0
    %693 = vmatpush2.msra.mxu0 0.0
    %694 = vmatprep.subr.mxu0 0.0
    %695 = vmatpush2.msra.mxu0 0.0
    %696 = vmatprep.subr.mxu0 0.0
    %697 = vmatpush2.msra.mxu0 0.0
    %698 = vmatprep.mubr.f32.mxu0 0.0
    %v699 = vand.u32 %v47, 4294901760
    %700 = vmatmul.mubr.f32.gmra.mxu0 %v699
    %v701 = vpop.f32.mrf.mxu0
    %v702 = vadd.f32 %v615, %v701
    %v703 = vpop.f32.mrf.mxu0
    %704 = vdwg.mxu0
    %v705 = vadd.f32 %v46, %v702
    %706 = vst [vmem:[#allocation2] sm:$0xff] %v705
    // Predicated region
    $region26: #{tpu_custom_call.1} parent=1 // pred_check
      %p707 = pneg %p41
    $region27: #{tpu_custom_call.1} parent=1 // pred_check_branch
      %709 = sbr.rel (%p707) target = $region29
    $region28: #{tpu_custom_call.1} parent=1 // pred_region
      %v710 = vld [vmem:[#allocation2] sm:$0xff]
      %v711 = vld [vmem:[%s2] sm:$0x1]
      %v713 = vlaneseq
      %v714 = vshrl.u32 %v713, 7
      %v715 = vsub.s32 0, %v714
      %v716 = vrot.slane %v711, %v715
      %v718 = vadd.f32 %v710, %v716
      %719 = vst [vmem:[#allocation8] sm:$0xff] %v718
    $region29: #{tpu_custom_call.1} parent=1 // pred_fallthru
      _
    // Predicated region
    $region30: #{tpu_custom_call.1} parent=1 // pred_check
      _
    $region31: #{tpu_custom_call.1} parent=1 // pred_check_branch
      %721 = sbr.rel (0) target = $region33
    $region32: #{tpu_custom_call.1} parent=1 // pred_region
      %s723 = ssub.s32 128, 128
      %724 = vsyncadd [#allocation5], %s723
      %s726 = sshll.u32 [#allocation8], 4
      %s727 = int_to_ptr.vmem [resolvable:$true] %s726
      %729 = dma.vmem_to_hbm [thread:$0]  %s727, 128, %s3, [#allocation5]
    $region33: #{tpu_custom_call.1} parent=1 // pred_fallthru
      _
    // Predicated region
    $region34: #{tpu_custom_call.1} parent=1 // pred_check
      _
    $region35: #{tpu_custom_call.1} parent=1 // pred_check_branch
      %731 = sbr.rel (0) target = $region37
    $region36: #{tpu_custom_call.1} parent=1 // pred_region
      %732 = dma.done [#allocation5], 128
    $region37: #{tpu_custom_call.1} parent=1 // pred_fallthru
      _
    %733 = vsyncpa [#allocation4], 1
    %734 = vsyncpa [#allocation7], 1
    %735 = vsyncpa [#allocation5], 1

</llo_original>
